<compile_context>
chip_gen: v6e
topology: v6e:2x2x1
jax: 0.10.0
libtpu: 0.0.40
codegen_flags: <defaults>
</compile_context>

<pallas_src>
import jax
import jax.numpy as jnp
from jax.experimental import pallas as pl
from jax.experimental.pallas import tpu as pltpu


def _closs_kernel(logit_ref, label_ref, out_ref):
    """Per-row hinge statistics for a (bm, C) tile of logits.

    Writes a lane-dense (8, bm) tile:
      row 0: HardHingeLoss per sample
      row 1: SoftHingeLoss per sample
      row 2: 1.0 if argmax(logit) != label else 0.0
      rows 3..7: zero padding (the HBM layout pads 3 -> 8 sublanes anyway)
    """
    x = logit_ref[...].astype(jnp.float32)              # (bm, C)
    labels = label_ref[...]                              # (bm, 1) int32
    bm, C = x.shape

    col = jax.lax.broadcasted_iota(jnp.int32, (bm, C), 1)
    onehot = col == labels                                # (bm, C)

    # L1 = logit[i, labels[i]]
    L1 = jnp.sum(jnp.where(onehot, x, 0.0), axis=1, keepdims=True)

    # Max over the non-label classes.  This equals
    #   top-1  when the prediction is wrong   (argmax != label)
    #   top-2  when the prediction is correct (argmax == label)
    # so it is the hinge competitor `u` of HardHingeLoss in both branches —
    # no top-2 / argmax machinery (one fewer cross-lane reduction).
    neg_inf = jnp.float32(-jnp.inf)
    max_excl = jnp.max(jnp.where(onehot, neg_inf, x), axis=1, keepdims=True)

    # Numerically stable logsumexp over classes (global max = max(max_excl, L1)).
    max_all = jnp.maximum(max_excl, L1)
    lse = max_all + jnp.log(jnp.sum(jnp.exp(x - max_all), axis=1, keepdims=True))

    # Prediction correct iff the label logit is >= every other logit.
    # (Exact float ties count as "correct"; torch.topk's argmax would tie-break
    #  by index — differs only under exact float ties.)
    f1 = L1 >= max_excl

    hard = jnp.maximum(1.0 - L1 + max_excl, 0.0)                          # (bm, 1)
    soft = jnp.maximum(1.0 - L1 + jnp.where(f1, max_excl, lse), 0.0)      # (bm, 1)
    wrong = jnp.where(f1, jnp.float32(0.0), jnp.float32(1.0))             # (bm, 1)

    # Pack into (bm, 8) and transpose to a lane-dense (8, bm) store.
    j = jax.lax.broadcasted_iota(jnp.int32, (bm, 8), 1)
    stats = jnp.where(j == 0, hard,
            jnp.where(j == 1, soft,
            jnp.where(j == 2, wrong, jnp.float32(0.0))))
    out_ref[...] = jnp.transpose(stats)


def _round_up(x, m):
    return ((x + m - 1) // m) * m


def _choose_tiling(N, C):
    """Pick (rows per grid step, padded N).

    The double-buffered logits tile is budgeted at ~6 MiB of f32-equivalent so
    the pipeline plus in-kernel f32 temporaries stays well inside the 32 MiB
    scoped-VMEM limit requested below on every generation (v7x has only 64 MiB
    physical VMEM; v5e's default scoped limit is just 16 MiB).
    """
    budget = 6 * 1024 * 1024
    cap = budget // (2 * C * 4)
    cap = max(128, min(1024, (cap // 128) * 128))
    if N <= cap:                      # single block; only 8-row alignment needed
        bm = _round_up(max(N, 1), 8)
        return bm, bm
    # Multi-step grid: bm must be a multiple of 128 so the (8, bm) output block
    # is lane-aligned; spread rows evenly to minimize padding.
    nblocks = -(-N // cap)
    bm = _round_up(-(-N // nblocks), 128)
    return bm, _round_up(N, bm)


def _per_sample_losses(logit, labels):
    """One Pallas pass over all samples; returns (hard, soft, wrong), each (N,)."""
    N, C = logit.shape
    bm, N_pad = _choose_tiling(N, C)
    grid = N_pad // bm

    if N_pad != N:                    # pad rows; padded rows are sliced off below
        logit = jnp.pad(logit, ((0, N_pad - N), (0, 0)))
        labels = jnp.pad(labels, (0, N_pad - N))
    labels2d = labels.reshape(N_pad, 1).astype(jnp.int32)

    # NOTE: logits are passed in their native dtype (e.g. bf16); the f32 cast
    # happens in-kernel, halving HBM->VMEM traffic for bf16 inputs.
    stats = pl.pallas_call(
        _closs_kernel,
        out_shape=jax.ShapeDtypeStruct((8, N_pad), jnp.float32),
        grid_spec=pltpu.PrefetchScalarGridSpec(
            num_scalar_prefetch=0,
            grid=(grid,),
            in_specs=[
                pl.BlockSpec((bm, C), lambda i: (i, 0)),
                pl.BlockSpec((bm, 1), lambda i: (i, 0)),
            ],
            out_specs=pl.BlockSpec((8, bm), lambda i: (0, i)),
        ),
        compiler_params=pltpu.CompilerParams(
            dimension_semantics=("parallel",),
            vmem_limit_bytes=32 * 1024 * 1024,
        ),
    )(logit, labels2d)
    # TODO(synk): for vocab-scale C add a second ("arbitrary", last) grid axis
    # over classes with an online max / sum-exp accumulation.
    return stats[0, :N], stats[1, :N], stats[2, :N]


def closs_forward(logit, labels, Lrate=True, Nratio=0.0):
    """JAX/Pallas equivalent of CLoss.forward."""
    N = logit.shape[0]
    hard, soft, wrong = _per_sample_losses(logit, labels)

    if not Lrate:
        return jnp.mean(soft)

    # Sort by hard loss ascending, carrying the soft loss along
    # (single multi-operand sort instead of argsort + two gathers).
    hard_sorted, soft_sorted = jax.lax.sort((hard, soft), num_keys=1)

    eps = float(Nratio)
    Ls = jnp.cumsum(hard_sorted)
    E = jnp.sum(wrong)                                        # #misclassified
    Cconst = (1.0 - eps) ** 2 * float(N) + (1.0 - eps) * E
    B = Cconst - jnp.arange(N, dtype=jnp.float32)             # C + [0,-1,-2,...]

    mask = Ls <= B
    num_selected = jnp.sum(mask.astype(jnp.int32))

    # Upbound = float(Ls[num_selected - 1] <= C - num_selected)
    idx_last = num_selected - 1
    idx_last = jnp.where(idx_last < 0, N - 1, idx_last)       # torch wrap-around
    upbound = (Ls[idx_last] <= Cconst - num_selected.astype(jnp.float32))
    upbound = upbound.astype(jnp.float32)

    num_selected = jnp.minimum(
        jnp.round(num_selected.astype(jnp.float32) + upbound),
        jnp.float32(N)).astype(jnp.int32)

    # mean(SoftHingeLoss) over the first num_selected samples in sorted order.
    sel = (jnp.arange(N) < num_selected).astype(jnp.float32)
    # Guard num_selected == 0 (torch would NaN on the mean of an empty tensor);
    # return 0 instead of dividing by zero.
    denom = jnp.maximum(num_selected, 1).astype(jnp.float32)
    return jnp.sum(soft_sorted * sel) / denom


if __name__ == "__main__":
    key = jax.random.PRNGKey(0)
    k1, k2 = jax.random.split(key)

    N, C = 16, 10                                    # samples x classes
    logit = jax.random.normal(k1, (N, C), dtype=jnp.float32) * 2.0
    labels = jax.random.randint(k2, (N,), 0, C, dtype=jnp.int32)

    loss = closs_forward(logit, labels, Lrate=True, Nratio=0.0)
    loss_soft = closs_forward(logit, labels, Lrate=False)
    loss, loss_soft = jax.block_until_ready((loss, loss_soft))

    # sanity: finite scalars
    assert loss.shape == () and loss_soft.shape == ()
    assert bool(jnp.isfinite(loss)) and bool(jnp.isfinite(loss_soft))
    print("KERNEL_OK")
</pallas_src>

<mosaic_0001>
module attributes {stable_mosaic.version = 11 : i64} {
  func.func @_closs_kernel(%arg0: i32, %arg1: memref<16x10xf32, #tpu.memory_space<vmem>>, %arg2: memref<16x1xi32, #tpu.memory_space<vmem>>, %arg3: memref<8x16xf32, #tpu.memory_space<vmem>>) attributes {dimension_semantics = [#tpu.dimension_semantics<parallel>], iteration_bounds = array<i64: 1>, scalar_prefetch = 0 : i64, scratch_operands = 0 : i64, tpu.core_type = #tpu.core_type<tc>, window_params = [{transform_indices = @transform_0, window_bounds = array<i64: 16, 10>}, {transform_indices = @transform_1, window_bounds = array<i64: 16, 1>}, {transform_indices = @transform_2, window_bounds = array<i64: 8, 16>}]} {
    %c0 = arith.constant 0 : index
    %c0_0 = arith.constant 0 : index
    %0 = vector.load %arg1[%c0, %c0_0] : memref<16x10xf32, #tpu.memory_space<vmem>>, vector<16x10xf32>
    %c0_1 = arith.constant 0 : index
    %c0_2 = arith.constant 0 : index
    %1 = vector.load %arg2[%c0_1, %c0_2] : memref<16x1xi32, #tpu.memory_space<vmem>>, vector<16x1xi32>
    %2 = tpu.iota {dimensions = array<i32: 1>} : vector<16x10xi32>
    %3 = vector.broadcast %1 : vector<16x1xi32> to vector<16x10xi32>
    %4 = arith.cmpi eq, %2, %3 : vector<16x10xi32>
    %cst = arith.constant 0.000000e+00 : f32
    %5 = vector.broadcast %cst : f32 to vector<16x10xf32>
    %6 = arith.select %4, %0, %5 : vector<16x10xi1>, vector<16x10xf32>
    %cst_3 = arith.constant dense<0.000000e+00> : vector<16xf32>
    %7 = vector.multi_reduction <add>, %6, %cst_3 [1] : vector<16x10xf32> to vector<16xf32>
    %8 = vector.shape_cast %7 : vector<16xf32> to vector<16x1xf32>
    %cst_4 = arith.constant 0xFF800000 : f32
    %9 = vector.broadcast %cst_4 : f32 to vector<16x10xf32>
    %10 = arith.select %4, %9, %0 : vector<16x10xi1>, vector<16x10xf32>
    %cst_5 = arith.constant dense<0xFF800000> : vector<16xf32>
    %11 = vector.multi_reduction <maximumf>, %10, %cst_5 [1] : vector<16x10xf32> to vector<16xf32>
    %12 = vector.shape_cast %11 : vector<16xf32> to vector<16x1xf32>
    %13 = arith.maximumf %12, %8 : vector<16x1xf32>
    %14 = vector.broadcast %13 : vector<16x1xf32> to vector<16x10xf32>
    %15 = arith.subf %0, %14 : vector<16x10xf32>
    %16 = math.exp %15 : vector<16x10xf32>
    %cst_6 = arith.constant dense<0.000000e+00> : vector<16xf32>
    %17 = vector.multi_reduction <add>, %16, %cst_6 [1] : vector<16x10xf32> to vector<16xf32>
    %18 = vector.shape_cast %17 : vector<16xf32> to vector<16x1xf32>
    %19 = math.log %18 : vector<16x1xf32>
    %20 = arith.addf %13, %19 : vector<16x1xf32>
    %21 = arith.cmpf oge, %8, %12 : vector<16x1xf32>
    %cst_7 = arith.constant 1.000000e+00 : f32
    %22 = vector.broadcast %cst_7 : f32 to vector<16x1xf32>
    %23 = arith.subf %22, %8 : vector<16x1xf32>
    %24 = arith.addf %23, %12 : vector<16x1xf32>
    %cst_8 = arith.constant 0.000000e+00 : f32
    %25 = vector.broadcast %cst_8 : f32 to vector<16x1xf32>
    %26 = arith.maximumf %24, %25 : vector<16x1xf32>
    %cst_9 = arith.constant 1.000000e+00 : f32
    %27 = vector.broadcast %cst_9 : f32 to vector<16x1xf32>
    %28 = arith.subf %27, %8 : vector<16x1xf32>
    %29 = arith.select %21, %12, %20 : vector<16x1xi1>, vector<16x1xf32>
    %30 = arith.addf %28, %29 : vector<16x1xf32>
    %cst_10 = arith.constant 0.000000e+00 : f32
    %31 = vector.broadcast %cst_10 : f32 to vector<16x1xf32>
    %32 = arith.maximumf %30, %31 : vector<16x1xf32>
    %cst_11 = arith.constant 0.000000e+00 : f32
    %cst_12 = arith.constant 1.000000e+00 : f32
    %33 = vector.broadcast %cst_11 : f32 to vector<16x1xf32>
    %34 = vector.broadcast %cst_12 : f32 to vector<16x1xf32>
    %35 = arith.select %21, %33, %34 : vector<16x1xi1>, vector<16x1xf32>
    %36 = tpu.iota {dimensions = array<i32: 1>} : vector<16x8xi32>
    %c0_i32 = arith.constant 0 : i32
    %37 = vector.broadcast %c0_i32 : i32 to vector<16x8xi32>
    %38 = arith.cmpi eq, %36, %37 : vector<16x8xi32>
    %c1_i32 = arith.constant 1 : i32
    %39 = vector.broadcast %c1_i32 : i32 to vector<16x8xi32>
    %40 = arith.cmpi eq, %36, %39 : vector<16x8xi32>
    %c2_i32 = arith.constant 2 : i32
    %41 = vector.broadcast %c2_i32 : i32 to vector<16x8xi32>
    %42 = arith.cmpi eq, %36, %41 : vector<16x8xi32>
    %cst_13 = arith.constant 0.000000e+00 : f32
    %43 = vector.shape_cast %35 : vector<16x1xf32> to vector<16x1xf32>
    %44 = vector.broadcast %43 : vector<16x1xf32> to vector<16x8xf32>
    %45 = vector.broadcast %cst_13 : f32 to vector<16x8xf32>
    %46 = arith.select %42, %44, %45 : vector<16x8xi1>, vector<16x8xf32>
    %47 = vector.shape_cast %32 : vector<16x1xf32> to vector<16x1xf32>
    %48 = vector.broadcast %47 : vector<16x1xf32> to vector<16x8xf32>
    %49 = arith.select %40, %48, %46 : vector<16x8xi1>, vector<16x8xf32>
    %50 = vector.shape_cast %26 : vector<16x1xf32> to vector<16x1xf32>
    %51 = vector.broadcast %50 : vector<16x1xf32> to vector<16x8xf32>
    %52 = arith.select %38, %51, %49 : vector<16x8xi1>, vector<16x8xf32>
    %53 = tpu.transpose %52, [1, 0] : vector<16x8xf32> -> vector<8x16xf32>
    %c0_14 = arith.constant 0 : index
    %c0_15 = arith.constant 0 : index
    %54 = vector.load %arg3[%c0_14, %c0_15] : memref<8x16xf32, #tpu.memory_space<vmem>>, vector<8x16xf32>
    tpu.vector_store %arg3[%c0_14, %c0_15], %53 {strides = array<i32>} : memref<8x16xf32, #tpu.memory_space<vmem>>, vector<8x16xf32>,
    return
  }
  func.func @transform_0(%arg0: i32) -> (i32, i32) {
    %c0_i32 = arith.constant 0 : i32
    %c0_i32_0 = arith.constant 0 : i32
    return %arg0, %c0_i32 : i32, i32
  }
  func.func @transform_1(%arg0: i32) -> (i32, i32) {
    %c0_i32 = arith.constant 0 : i32
    %c0_i32_0 = arith.constant 0 : i32
    return %arg0, %c0_i32 : i32, i32
  }
  func.func @transform_2(%arg0: i32) -> (i32, i32) {
    %c0_i32 = arith.constant 0 : i32
    %c0_i32_0 = arith.constant 0 : i32
    return %c0_i32, %arg0 : i32, i32
  }
}

</mosaic_0001>

<llo_original>
// kernel: tpu_custom_call.1
$region0: #{tpu_custom_call.1}
  #allocation0 [shape = 'u32[]', space=smem, size = 0x4, offset = 0x4, fixed_abs, tag = 'smem constant byte address 0x4 - core index']
  #allocation1 [shape = 'u32[144,128]{1,0:T(1,128)}', space=vmem, size = 0x12000, scoped, tag = 'internal scratch']
  %s0 = inlined_call_operand.vmem [shape: f32[16,10], index: 0, kind: input, shape index: {}]
  %s1 = inlined_call_operand.vmem [shape: s32[16,1], index: 1, kind: input, shape index: {}]
  %s2 = inlined_call_operand.hbm [shape: f32[8,16], index: 2, kind: output, shape index: {}]
  %s3 = sld [smem:[#allocation0]]
  $region18: #{tpu_custom_call.1} parent=0
    _
  %s5 = ssub.s32 1, %s3
  %s6 = scalar_select 0, %s5, %s3
  $region1: #{tpu_custom_call.1} parent=0
    #allocation2 [shape = 'u8[4096]{0}', space=vmem, size = 0x1000, scoped, tag = 'output window, operand 0, single buffered']
    #allocation3 [shape = 's32[1]{0}', space=sflag, size = 0x4, scoped, tag = 'scoped memory for tpu_custom_call.1']
    %7 = vsyncpa [#allocation3], 0
    // Predicated region
    $region2: #{tpu_custom_call.1} parent=1 // pred_check
      _
    $region3: #{tpu_custom_call.1} parent=1 // pred_check_branch
      %9 = sbr.rel (0) target = $region5
    $region4: #{tpu_custom_call.1} parent=1 // pred_region
      _
    $region5: #{tpu_custom_call.1} parent=1 // pred_fallthru
      _
    // Predicated region
    $region6: #{tpu_custom_call.1} parent=1 // pred_check
      _
    $region7: #{tpu_custom_call.1} parent=1 // pred_check_branch
      %11 = sbr.rel (0) target = $region9
    $region8: #{tpu_custom_call.1} parent=1 // pred_region
      _
    $region9: #{tpu_custom_call.1} parent=1 // pred_fallthru
      _
    %v12 = vld [vmem:[%s0] sm:$0xff]
    %v13 = vld [vmem:[%s0 + $0x8] sm:$0xff]
    %v14 = vld [vmem:[%s1] sm:$0xff]
    %v15 = vld [vmem:[%s1 + $0x8] sm:$0xff]
    %v16 = vlaneseq
    %v17 = vand.u32 %v16, 127
    %18 = vset.pattern.permute.xlu0 0
    %19 = vperm.xlu0 %18, %v14
    %v20 = vpop.permute.xlu0 %19
    %21 = vset.pattern.permute.xlu0 0
    %22 = vperm.xlu0 %21, %v15
    %v23 = vpop.permute.xlu0 %22
    %vm24 = vcmp.eq.s32.totalorder %v17, %v20
    %vm25 = vcmp.eq.s32.totalorder %v17, %v23
    %v26 = vsel %vm24, %v12, 0.0
    %v27 = vsel %vm25, %v13, 0.0
    %vm28 = vcmask 80896
    %v29 = vsel %vm28, %v26, 0.0
    %30 = vadd.xlane.f32.xlu0 %v29
    %v31 = vpop.xlane.xlu0 %30
    %v32 = vsel %vm28, %v27, 0.0
    %33 = vadd.xlane.f32.xlu0 %v32
    %v34 = vpop.xlane.xlu0 %33
    %v35 = vsel %vm24, -inf, %v12
    %v36 = vsel %vm25, -inf, %v13
    %v37 = vsel %vm28, %v35, -inf
    %38 = vmax.xlane.f32.xlu0 %v37
    %v39 = vpop.xlane.xlu0 %38
    %v40 = vsel %vm28, %v36, -inf
    %41 = vmax.xlane.f32.xlu0 %v40
    %v42 = vpop.xlane.xlu0 %41
    %v43 = vmax.f32 %v39, %v31
    %v44 = vmax.f32 %v42, %v34
    %v45 = vsub.f32 %v12, %v43
    %v46 = vsub.f32 %v13, %v44
    %v47 = vmul.f32 %v45, 1.442695
    %v48 = vpow.pop %v47
    %v49 = vmul.f32 %v46, 1.442695
    %v50 = vpow.pop %v49
    %v51 = vsel %vm28, %v48, 0.0
    %52 = vadd.xlane.f32.xlu0 %v51
    %v53 = vpop.xlane.xlu0 %52
    %v54 = vsel %vm28, %v50, 0.0
    %55 = vadd.xlane.f32.xlu0 %v54
    %v56 = vpop.xlane.xlu0 %55
    %v57 = vlog2.pop %v53
    %v58 = vmul.f32 %v57, 0.6931472
    %v59 = vlog2.pop %v56
    %v60 = vmul.f32 %v59, 0.6931472
    %v61 = vadd.f32 %v43, %v58
    %v62 = vadd.f32 %v44, %v60
    %vm63 = vcmp.ge.f32.partialorder %v31, %v39
    %vm64 = vcmp.ge.f32.partialorder %v34, %v42
    %v65 = vsub.f32 1.0, %v31
    %v66 = vsub.f32 1.0, %v34
    %v67 = vadd.f32 %v65, %v39
    %v68 = vadd.f32 %v66, %v42
    %v69 = vmax.f32 %v67, 0.0
    %v70 = vmax.f32 %v68, 0.0
    %v71 = vsel %vm63, %v39, %v61
    %v72 = vsel %vm64, %v42, %v62
    %v73 = vadd.f32 %v65, %v71
    %v74 = vadd.f32 %v66, %v72
    %v75 = vmax.f32 %v73, 0.0
    %v76 = vmax.f32 %v74, 0.0
    %v77 = vsel %vm63, 0.0, 1.0
    %v78 = vsel %vm64, 0.0, 1.0
    %vm79 = vcmp.eq.s32.totalorder %v17, 0
    %vm80 = vcmp.eq.s32.totalorder %v17, 1
    %vm81 = vcmp.eq.s32.totalorder %v17, 2
    %v82 = vsel %vm81, %v77, 0.0
    %v83 = vsel %vm81, %v78, 0.0
    %v84 = vsel %vm80, %v75, %v82
    %v85 = vsel %vm80, %v76, %v83
    %v86 = vsel %vm79, %v69, %v84
    %v87 = vsel %vm79, %v70, %v85
    %88 = vxpose.xlu0.b32.start [1/16] %v86, 128
    %89 = vxpose.xlu0.b32.cont [2/16] %v87, 128
    %90 = vxpose.xlu0.b32.cont [3/16] 0.0, 128
    %91 = vxpose.xlu0.b32.cont [4/16] 0.0, 128
    %92 = vxpose.xlu0.b32.cont [5/16] 0.0, 128
    %93 = vxpose.xlu0.b32.cont [6/16] 0.0, 128
    %94 = vxpose.xlu0.b32.cont [7/16] 0.0, 128
    %95 = vxpose.xlu0.b32.cont [8/16] 0.0, 128
    %96 = vxpose.xlu0.b32.cont [9/16] 0.0, 128
    %97 = vxpose.xlu0.b32.cont [10/16] 0.0, 128
    %98 = vxpose.xlu0.b32.cont [11/16] 0.0, 128
    %99 = vxpose.xlu0.b32.cont [12/16] 0.0, 128
    %100 = vxpose.xlu0.b32.cont [13/16] 0.0, 128
    %101 = vxpose.xlu0.b32.cont [14/16] 0.0, 128
    %102 = vxpose.xlu0.b32.cont [15/16] 0.0, 128
    %103 = vxpose.xlu0.b32.end [16/16] 0.0, 128
    %v104 = vpop.trf.xlu0
    %v105 = vpop.trf.xlu0
    %v106 = vpop.trf.xlu0
    %v107 = vpop.trf.xlu0
    %v108 = vpop.trf.xlu0
    %v109 = vpop.trf.xlu0
    %v110 = vpop.trf.xlu0
    %v111 = vpop.trf.xlu0
    %v112 = vpop.trf.xlu0
    %v113 = vpop.trf.xlu0
    %v114 = vpop.trf.xlu0
    %v115 = vpop.trf.xlu0
    %v116 = vpop.trf.xlu0
    %v117 = vpop.trf.xlu0
    %v118 = vpop.trf.xlu0
    %v119 = vpop.trf.xlu0
    %vm120 = vcmask 130048
    %121 = vst.msk [vmem:[#allocation2] sm:$0xff] %vm120, %v104
    // Predicated region
    $region10: #{tpu_custom_call.1} parent=1 // pred_check
      _
    $region11: #{tpu_custom_call.1} parent=1 // pred_check_branch
      %123 = sbr.rel (0) target = $region13
    $region12: #{tpu_custom_call.1} parent=1 // pred_region
      %s125 = ssub.s32 128, 128
      %126 = vsyncadd [#allocation3], %s125
      %s128 = sshll.u32 [#allocation2], 4
      %s129 = int_to_ptr.vmem [resolvable:$true] %s128
      %131 = dma.vmem_to_hbm [thread:$0]  %s129, 128, %s2, [#allocation3]
    $region13: #{tpu_custom_call.1} parent=1 // pred_fallthru
      _
    // Predicated region
    $region14: #{tpu_custom_call.1} parent=1 // pred_check
      _
    $region15: #{tpu_custom_call.1} parent=1 // pred_check_branch
      %133 = sbr.rel (0) target = $region17
    $region16: #{tpu_custom_call.1} parent=1 // pred_region
      %134 = dma.done [#allocation3], 128
    $region17: #{tpu_custom_call.1} parent=1 // pred_fallthru
      _
    %135 = vsyncpa [#allocation3], 1

</llo_original>
